<compile_context>
chip_gen: v7x
topology: tpu7x:2x2x1
jax: 0.10.0
libtpu: 0.0.40
codegen_flags: <defaults>
</compile_context>

<pallas_src>
import jax
import jax.numpy as jnp
from jax.experimental import pallas as pl
from jax.experimental.pallas import tpu as pltpu

EPS = 1e-8  # kept for the reference; a constant logit shift is a softmax no-op


def _vmem_capacity_bytes():
    """Physical VMEM per TensorCore; falls back to the v7x minimum (64 MiB)."""
    try:
        info = pltpu.get_tpu_info()
        for attr in ("vmem_capacity_bytes", "vmem_bytes", "vmem_size_bytes"):
            v = getattr(info, attr, None)
            if v:
                return int(v)
    except Exception:
        pass
    return 64 * 1024 * 1024


def _choose_tiling(B, D, itemsize):
    """Pick (row_tile, vmem_limit_bytes).

    Per-grid-step working set:
      2 inputs x 2 pipeline buffers x TB x D x itemsize     (BlockSpec double-buffering)
      ~6 tile-sized f32 temporaries (casts, shifts, exps, product) = 6 x TB x D x 4
    Use at most ~half of the per-generation VMEM limit for it and make blocks as
    large as that allows: this kernel is HBM-bound and per-grid-step overhead is
    ~0.35 us, so MiB-scale input blocks are what reach the HBM roofline.
    """
    vmem = _vmem_capacity_bytes()
    vmem_limit = min(int(vmem * 3 // 4), 96 * 1024 * 1024)   # 48 MiB v7x / 96 MiB v5e,v6e
    per_row = 4 * D * itemsize + 6 * D * 4
    max_rows = max(8, (vmem_limit // 2) // per_row)

    row_align = max(8, 32 // max(1, itemsize))               # f32:8, bf16:16, int8/fp8:32
    tb = min(4096, int(max_rows))
    tb = max(row_align, (tb // row_align) * row_align)
    padded_b = ((B + row_align - 1) // row_align) * row_align
    tb = min(tb, padded_b)                                   # never bigger than padded batch
    return tb, vmem_limit


def kl_divergence(x, y, *, block_rows=None):
    """Pallas equivalent of KLDivergence().forward(x, y) for 2-D (B, D) inputs."""
    assert x.shape == y.shape and x.ndim == 2
    B, D = x.shape
    itemsize = jnp.dtype(x.dtype).itemsize

    tb_auto, vmem_limit = _choose_tiling(B, D, itemsize)
    TB = block_rows if block_rows is not None else tb_auto
    num_tiles = pl.cdiv(B, TB)
    needs_mask = (B % TB) != 0  # ragged last tile reads garbage rows -> mask per row

    def kernel(x_ref, y_ref, o_ref):
        xf = x_ref[...].astype(jnp.float32)
        yf = y_ref[...].astype(jnp.float32)

        # Numerically stable shifted logits ('+eps' is a shift-invariant no-op).
        x_shift = xf - jnp.max(xf, axis=-1, keepdims=True)
        y_shift = yf - jnp.max(yf, axis=-1, keepdims=True)

        x_sum = jnp.sum(jnp.exp(x_shift), axis=-1, keepdims=True)   # (TB, 1)
        y_exp = jnp.exp(y_shift)
        y_sum = jnp.sum(y_exp, axis=-1, keepdims=True)               # (TB, 1)

        # Per-row KL via: sum_j p_j*(log p_j - log q_j)
        #   = (1/y_sum) * sum_j y_exp_j*(y_shift_j - x_shift_j) + log(x_sum) - log(y_sum)
        # (uses sum_j p_j = 1; if p_j underflows to 0, 0*finite = 0 as in PyTorch).
        num = jnp.sum(y_exp * (y_shift - x_shift), axis=-1, keepdims=True)
        row_kl = (num * pl.reciprocal(y_sum, approx=True)
                  + (jnp.log(x_sum) - jnp.log(y_sum)))               # (TB, 1)

        if needs_mask:
            rows = (jax.lax.broadcasted_iota(jnp.int32, row_kl.shape, 0)
                    + pl.program_id(0) * TB)
            row_kl = jnp.where(rows < B, row_kl, 0.0)

        partial = jnp.sum(row_kl)
        # Lane-dense, unmasked (8,128) store; each tile owns its own output block
        # so the grid axis can stay "parallel" (megacore sharding on v7x).
        o_ref[...] = jnp.full(o_ref.shape, partial, dtype=jnp.float32)

    bytes_accessed = 2 * B * D * itemsize + num_tiles * 8 * 128 * 4
    cost = pl.CostEstimate(
        flops=8 * B * D,
        transcendentals=2 * B * D + 3 * B,
        bytes_accessed=bytes_accessed,
    )

    partials = pl.pallas_call(
        kernel,
        out_shape=jax.ShapeDtypeStruct((num_tiles, 8, 128), jnp.float32),
        grid=(num_tiles,),
        in_specs=[
            pl.BlockSpec((TB, D), lambda i: (i, 0)),
            pl.BlockSpec((TB, D), lambda i: (i, 0)),
        ],
        out_specs=pl.BlockSpec((1, 8, 128), lambda i: (i, 0, 0)),
        compiler_params=pltpu.CompilerParams(
            dimension_semantics=("parallel",),
            vmem_limit_bytes=vmem_limit,
        ),
        cost_estimate=cost,
    )(x, y)

    # Tiny final reduction + 'mean' divide in plain JAX.
    return jnp.sum(partials[:, 0, 0]) / jnp.float32(B * D)


def _reference(x, y):
    # Pure-JAX reference mirroring the PyTorch module exactly (with +eps).
    xf = x.astype(jnp.float32) + EPS
    yf = y.astype(jnp.float32) + EPS
    log_q = jax.nn.log_softmax(xf, axis=-1)
    p = jax.nn.softmax(yf, axis=-1)
    return jnp.mean(jnp.where(p > 0, p * (jnp.log(p) - log_q), 0.0))


if __name__ == "__main__":
    key = jax.random.PRNGKey(0)
    kx, ky = jax.random.split(key)

    # Case 1: non-multiple of the row tile -> exercises grid + ragged-row masking.
    B, D = 20, 128
    x = jax.random.normal(kx, (B, D), dtype=jnp.float32)
    y = jax.random.normal(ky, (B, D), dtype=jnp.float32)
    loss = kl_divergence(x, y, block_rows=8)       # 3 tiles, last one partial
    jax.block_until_ready(loss)
    ref = _reference(x, y)
    assert jnp.allclose(loss, ref, atol=2e-5, rtol=1e-4), (loss, ref)

    # Case 2: aligned shape, auto-selected (byte-budgeted) tile size.
    B2, D2 = 64, 256
    x2 = jax.random.normal(kx, (B2, D2), dtype=jnp.float32)
    y2 = jax.random.normal(ky, (B2, D2), dtype=jnp.float32)
    loss2 = kl_divergence(x2, y2)
    jax.block_until_ready(loss2)
    ref2 = _reference(x2, y2)
    assert jnp.allclose(loss2, ref2, atol=2e-5, rtol=1e-4), (loss2, ref2)

    # Case 3: bf16 inputs fed directly (halved HBM traffic); math still in f32.
    B3, D3 = 24, 128
    x3 = jax.random.normal(kx, (B3, D3), dtype=jnp.bfloat16)
    y3 = jax.random.normal(ky, (B3, D3), dtype=jnp.bfloat16)
    loss3 = kl_divergence(x3, y3)
    jax.block_until_ready(loss3)
    ref3 = _reference(x3, y3)
    assert jnp.allclose(loss3, ref3, atol=5e-5, rtol=1e-4), (loss3, ref3)

    print("KERNEL_OK")
</pallas_src>

<mosaic_0001>
module attributes {stable_mosaic.version = 11 : i64} {
  func.func @kernel(%arg0: i32, %arg1: memref<8x128xf32, #tpu.memory_space<vmem>>, %arg2: memref<8x128xf32, #tpu.memory_space<vmem>>, %arg3: memref<1x8x128xf32, #tpu.memory_space<vmem>>) attributes {dimension_semantics = [#tpu.dimension_semantics<parallel>], iteration_bounds = array<i64: 3>, scalar_prefetch = 0 : i64, scratch_operands = 0 : i64, tpu.core_type = #tpu.core_type<tc>, window_params = [{transform_indices = @transform_0, window_bounds = array<i64: 8, 128>}, {transform_indices = @transform_1, window_bounds = array<i64: 8, 128>}, {transform_indices = @transform_2, window_bounds = array<i64: 1, 8, 128>}]} {
    %c0 = arith.constant 0 : index
    %c0_0 = arith.constant 0 : index
    %0 = vector.load %arg1[%c0, %c0_0] : memref<8x128xf32, #tpu.memory_space<vmem>>, vector<8x128xf32>
    %c0_1 = arith.constant 0 : index
    %c0_2 = arith.constant 0 : index
    %1 = vector.load %arg2[%c0_1, %c0_2] : memref<8x128xf32, #tpu.memory_space<vmem>>, vector<8x128xf32>
    %cst = arith.constant dense<0xFF800000> : vector<8xf32>
    %2 = vector.multi_reduction <maximumf>, %0, %cst [1] : vector<8x128xf32> to vector<8xf32>
    %3 = vector.shape_cast %2 : vector<8xf32> to vector<8x1xf32>
    %4 = vector.broadcast %3 : vector<8x1xf32> to vector<8x128xf32>
    %5 = arith.subf %0, %4 : vector<8x128xf32>
    %cst_3 = arith.constant dense<0xFF800000> : vector<8xf32>
    %6 = vector.multi_reduction <maximumf>, %1, %cst_3 [1] : vector<8x128xf32> to vector<8xf32>
    %7 = vector.shape_cast %6 : vector<8xf32> to vector<8x1xf32>
    %8 = vector.broadcast %7 : vector<8x1xf32> to vector<8x128xf32>
    %9 = arith.subf %1, %8 : vector<8x128xf32>
    %10 = math.exp %5 : vector<8x128xf32>
    %cst_4 = arith.constant dense<0.000000e+00> : vector<8xf32>
    %11 = vector.multi_reduction <add>, %10, %cst_4 [1] : vector<8x128xf32> to vector<8xf32>
    %12 = vector.shape_cast %11 : vector<8xf32> to vector<8x1xf32>
    %13 = math.exp %9 : vector<8x128xf32>
    %cst_5 = arith.constant dense<0.000000e+00> : vector<8xf32>
    %14 = vector.multi_reduction <add>, %13, %cst_5 [1] : vector<8x128xf32> to vector<8xf32>
    %15 = vector.shape_cast %14 : vector<8xf32> to vector<8x1xf32>
    %16 = arith.subf %9, %5 : vector<8x128xf32>
    %17 = arith.mulf %13, %16 : vector<8x128xf32>
    %cst_6 = arith.constant dense<0.000000e+00> : vector<8xf32>
    %18 = vector.multi_reduction <add>, %17, %cst_6 [1] : vector<8x128xf32> to vector<8xf32>
    %19 = vector.shape_cast %18 : vector<8xf32> to vector<8x1xf32>
    %20 = tpu.reciprocal %15 {approx = true} : vector<8x1xf32> -> vector<8x1xf32>
    %21 = arith.mulf %19, %20 : vector<8x1xf32>
    %22 = math.log %12 : vector<8x1xf32>
    %23 = math.log %15 : vector<8x1xf32>
    %24 = arith.subf %22, %23 : vector<8x1xf32>
    %25 = arith.addf %21, %24 : vector<8x1xf32>
    %26 = tpu.iota {dimensions = array<i32: 0>} : vector<8x1xi32>
    %c8_i32 = arith.constant 8 : i32
    %27 = arith.muli %arg0, %c8_i32 : i32
    %28 = vector.broadcast %27 : i32 to vector<8x1xi32>
    %29 = arith.addi %26, %28 : vector<8x1xi32>
    %c20_i32 = arith.constant 20 : i32
    %30 = vector.broadcast %c20_i32 : i32 to vector<8x1xi32>
    %31 = arith.cmpi slt, %29, %30 : vector<8x1xi32>
    %cst_7 = arith.constant 0.000000e+00 : f32
    %32 = vector.broadcast %cst_7 : f32 to vector<8x1xf32>
    %33 = arith.select %31, %25, %32 : vector<8x1xi1>, vector<8x1xf32>
    %34 = vector.shape_cast %33 : vector<8x1xf32> to vector<1x8x1xf32>
    %cst_8 = arith.constant dense<0.000000e+00> : vector<1xf32>
    %35 = vector.multi_reduction <add>, %34, %cst_8 [1, 2] : vector<1x8x1xf32> to vector<1xf32>
    %36 = vector.shape_cast %35 : vector<1xf32> to vector<1x1x1xf32>
    %37 = vector.extract %36[0, 0, 0] : f32 from vector<1x1x1xf32>
    %38 = vector.broadcast %37 : f32 to vector<1x8x128xf32>
    %c0_9 = arith.constant 0 : index
    %c0_10 = arith.constant 0 : index
    %c0_11 = arith.constant 0 : index
    %39 = vector.load %arg3[%c0_9, %c0_10, %c0_11] : memref<1x8x128xf32, #tpu.memory_space<vmem>>, vector<1x8x128xf32>
    tpu.vector_store %arg3[%c0_9, %c0_10, %c0_11], %38 {strides = array<i32>} : memref<1x8x128xf32, #tpu.memory_space<vmem>>, vector<1x8x128xf32>,
    return
  }
  func.func @transform_0(%arg0: i32) -> (i32, i32) {
    %c0_i32 = arith.constant 0 : i32
    %c0_i32_0 = arith.constant 0 : i32
    return %arg0, %c0_i32 : i32, i32
  }
  func.func @transform_1(%arg0: i32) -> (i32, i32) {
    %c0_i32 = arith.constant 0 : i32
    %c0_i32_0 = arith.constant 0 : i32
    return %arg0, %c0_i32 : i32, i32
  }
  func.func @transform_2(%arg0: i32) -> (i32, i32, i32) {
    %c0_i32 = arith.constant 0 : i32
    %c0_i32_0 = arith.constant 0 : i32
    %c0_i32_1 = arith.constant 0 : i32
    return %arg0, %c0_i32, %c0_i32_0 : i32, i32, i32
  }
}

</mosaic_0001>

<llo_original>
// kernel: tpu_custom_call.1
$region0: #{tpu_custom_call.1}
  #allocation0 [shape = 'u32[]', space=smem, size = 0x4, offset = 0x4, fixed_abs, tag = 'smem constant byte address 0x4 - core index']
  #allocation1 [shape = 'u32[144,128]{1,0:T(1,128)}', space=vmem, size = 0x12000, scoped, tag = 'internal scratch']
  %s0 = inlined_call_operand.hbm [shape: f32[20,128], index: 0, kind: input, shape index: {}]
  %s1 = inlined_call_operand.hbm [shape: f32[20,128], index: 1, kind: input, shape index: {}]
  %s2 = inlined_call_operand.hbm [shape: f32[3,8,128], index: 2, kind: output, shape index: {}]
  %s3 = sld [smem:[#allocation0]]
  $region49: #{tpu_custom_call.1} parent=0
    _
  %s5 = ssub.s32 1, %s3
  %s6 = scalar_select 0, %s5, %s3
  $region1: #{tpu_custom_call.1} parent=0
    #allocation2 [shape = 'u8[8192]{0}', space=vmem, size = 0x2000, scoped, tag = 'input window, operand 0']
    #allocation3 [shape = 's32[2]{0}', space=sflag, size = 0x8, scoped, tag = 'scoped memory for tpu_custom_call.1']
    #allocation4 [shape = 's32[2]{0}', space=sflag, size = 0x8, scoped, tag = 'scoped memory for tpu_custom_call.1']
    #allocation5 [shape = 'u8[8192]{0}', space=vmem, size = 0x2000, scoped, tag = 'input window, operand 1']
    #allocation6 [shape = 's32[2]{0}', space=sflag, size = 0x8, scoped, tag = 'scoped memory for tpu_custom_call.1']
    #allocation7 [shape = 'u8[8192]{0}', space=vmem, size = 0x2000, scoped, tag = 'output window, operand 0']
    %7 = vsyncpa [#allocation3], 0
    %s8 = scalar_lea.sflag [#allocation3], 1
    %9 = vsyncpa %s8, 0
    %10 = vsyncpa [#allocation6], 0
    %s11 = scalar_lea.sflag [#allocation6], 1
    %12 = vsyncpa %s11, 0
    %13 = vsyncpa [#allocation4], 0
    %s14 = scalar_lea.sflag [#allocation4], 1
    %15 = vsyncpa %s14, 0
    loop: start=0, step=1, limit=5
    $region2: #{tpu_custom_call.1} parent=1 // loop_pre_header
      _
    $region3: #{tpu_custom_call.1} parent=1 // loop_header
      %s17 = sphi 0, %s21
      %p18 = scmp.ge.s32.totalorder %s17, 5
      %s27 = sphi 0, %s29
      %s30 = sphi 0, %s27
      %s31 = sphi 0, %s30
      %s47 = sphi 0, %s31
      %s53 = sphi 0, %s55
      %s56 = sphi 0, %s53
      %s57 = sphi 0, %s56
      %s73 = sphi 0, %s57
      %s79 = sphi 0, %s81
      %s82 = sphi 0, %s79
      %s83 = sphi 0, %s82
      %s99 = sphi 0, %s83
    $region4: #{tpu_custom_call.1} parent=1 // loop_header_branch
      %20 = sbr.rel (%p18) target = $region8
    $region5: #{tpu_custom_call.1} parent=1 // loop_body
      %s22 = ssub.s32 %s17, 1
      %s23 = ssub.s32 %s17, 2
      %s24 = sadd.s32 %s17, 1
      %s25 = ssub.s32 %s17, %s24
      %p26 = scmp.eq.s32.totalorder %s25, 0
      %s28 = sadd.s32 %s27, 1
      %s29 = scalar_select %p26, %s27, %s28
      %p32 = pneg %p26
      %p33 = scmp.eq.s32.totalorder %s17, 2
      %p34 = por %p32, %p33
      %p35 = scmp.ne.s32.totalorder %s27, %s30
      %p36 = scmp.eq.s32.totalorder %s17, 0
      %p37 = por %p35, %p36
      %p38 = scmp.ne.s32.totalorder %s27, %s30
      %p39 = scmp.eq.s32.totalorder %s22, 2
      %p40 = por %p38, %p39
      %p41 = scmp.ne.s32.totalorder %s30, %s31
      %p42 = scmp.eq.s32.totalorder %s22, 0
      %p43 = por %p41, %p42
      %p44 = scmp.ne.s32.totalorder %s30, %s31
      %p45 = scmp.eq.s32.totalorder %s23, 2
      %p46 = por %p44, %p45
      %p48 = scmp.ne.s32.totalorder %s31, %s47
      %p49 = scmp.eq.s32.totalorder %s23, 0
      %p50 = por %p48, %p49
      %s51 = ssub.s32 %s17, %s24
      %p52 = scmp.eq.s32.totalorder %s51, 0
      %s54 = sadd.s32 %s53, 1
      %s55 = scalar_select %p52, %s53, %s54
      %p58 = pneg %p52
      %p59 = scmp.eq.s32.totalorder %s17, 2
      %p60 = por %p58, %p59
      %p61 = scmp.ne.s32.totalorder %s53, %s56
      %p62 = scmp.eq.s32.totalorder %s17, 0
      %p63 = por %p61, %p62
      %p64 = scmp.ne.s32.totalorder %s53, %s56
      %p65 = scmp.eq.s32.totalorder %s22, 2
      %p66 = por %p64, %p65
      %p67 = scmp.ne.s32.totalorder %s56, %s57
      %p68 = scmp.eq.s32.totalorder %s22, 0
      %p69 = por %p67, %p68
      %p70 = scmp.ne.s32.totalorder %s56, %s57
      %p71 = scmp.eq.s32.totalorder %s23, 2
      %p72 = por %p70, %p71
      %p74 = scmp.ne.s32.totalorder %s57, %s73
      %p75 = scmp.eq.s32.totalorder %s23, 0
      %p76 = por %p74, %p75
      %s77 = ssub.s32 %s17, %s24
      %p78 = scmp.eq.s32.totalorder %s77, 0
      %s80 = sadd.s32 %s79, 1
      %s81 = scalar_select %p78, %s79, %s80
      %p84 = pneg %p78
      %p85 = scmp.eq.s32.totalorder %s17, 2
      %p86 = por %p84, %p85
      %p87 = scmp.ne.s32.totalorder %s79, %s82
      %p88 = scmp.eq.s32.totalorder %s17, 0
      %p89 = por %p87, %p88
      %p90 = scmp.ne.s32.totalorder %s79, %s82
      %p91 = scmp.eq.s32.totalorder %s22, 2
      %p92 = por %p90, %p91
      %p93 = scmp.ne.s32.totalorder %s82, %s83
      %p94 = scmp.eq.s32.totalorder %s22, 0
      %p95 = por %p93, %p94
      %p96 = scmp.ne.s32.totalorder %s82, %s83
      %p97 = scmp.eq.s32.totalorder %s23, 2
      %p98 = por %p96, %p97
      %p100 = scmp.ne.s32.totalorder %s83, %s99
      %p101 = scmp.eq.s32.totalorder %s23, 0
      %p102 = por %p100, %p101
      %p103 = scmp.le.s32.totalorder 1, %s17
      %p104 = scmp.lt.s32.totalorder %s17, 4
      %p105 = pnand %p103, %p104
      %p106 = pneg %p105
      // Predicated region
      $region9: #{tpu_custom_call.1} parent=5 // pred_check
        _
      $region10: #{tpu_custom_call.1} parent=5 // pred_check_branch
        %108 = sbr.rel (%p105) target = $region12
      $region11: #{tpu_custom_call.1} parent=5 // pred_region
        %s109 = ssub.s32 %s17, 1
      $region12: #{tpu_custom_call.1} parent=5 // pred_fallthru
        _
      %p110 = scmp.lt.s32.totalorder %s17, 3
      // Predicated region
      $region13: #{tpu_custom_call.1} parent=5 // pred_check
        %p111 = pneg %p110
      $region14: #{tpu_custom_call.1} parent=5 // pred_check_branch
        %113 = sbr.rel (%p111) target = $region16
      $region15: #{tpu_custom_call.1} parent=5 // pred_region
        // Predicated region
        $region17: #{tpu_custom_call.1} parent=15 // pred_check
          %p114 = pneg %p37
        $region18: #{tpu_custom_call.1} parent=15 // pred_check_branch
          %116 = sbr.rel (%p114) target = $region20
        $region19: #{tpu_custom_call.1} parent=15 // pred_region
          %s117 = sand.u32 %s27, 1
          %s118 = scalar_lea.sflag [#allocation3], %s117
          %s119 = sand.u32 %s27, 1
          %s120 = smul.addr %s119, 8
          %s121 = scalar_lea.vmem [#allocation2], %s120
          %s123 = ssub.s32 128, 128
          %124 = vsyncadd %s118, %s123
          %s125 = smul.addr %s17, 128
          %s126 = scalar_lea.hbm %s0, %s125
          %s128 = sshll.u32 %s121, 4
          %s129 = int_to_ptr.vmem [resolvable:$true] %s128
          %131 = dma.hbm_to_vmem [thread:$0]  %s126, 128, %s129, %s118
        $region20: #{tpu_custom_call.1} parent=15 // pred_fallthru
          _
        // Predicated region
        $region21: #{tpu_custom_call.1} parent=15 // pred_check
          %p132 = pneg %p63
        $region22: #{tpu_custom_call.1} parent=15 // pred_check_branch
          %134 = sbr.rel (%p132) target = $region24
        $region23: #{tpu_custom_call.1} parent=15 // pred_region
          %s135 = sand.u32 %s53, 1
          %s136 = scalar_lea.sflag [#allocation6], %s135
          %s137 = sand.u32 %s53, 1
          %s138 = smul.addr %s137, 8
          %s139 = scalar_lea.vmem [#allocation5], %s138
          %s141 = ssub.s32 128, 128
          %142 = vsyncadd %s136, %s141
          %s143 = smul.addr %s17, 128
          %s144 = scalar_lea.hbm %s1, %s143
          %s146 = sshll.u32 %s139, 4
          %s147 = int_to_ptr.vmem [resolvable:$true] %s146
          %149 = dma.hbm_to_vmem [thread:$0]  %s144, 128, %s147, %s136
        $region24: #{tpu_custom_call.1} parent=15 // pred_fallthru
          _
      $region16: #{tpu_custom_call.1} parent=5 // pred_fallthru
        _
      %p150 = scmp.le.s32.totalorder 1, %s17
      %p151 = scmp.lt.s32.totalorder %s17, 4
      %p152 = pnand %p150, %p151
      %p153 = pneg %p152
      // Predicated region
      $region25: #{tpu_custom_call.1} parent=5 // pred_check
        _
      $region26: #{tpu_custom_call.1} parent=5 // pred_check_branch
        %155 = sbr.rel (%p152) target = $region28
      $region27: #{tpu_custom_call.1} parent=5 // pred_region
        %s156 = ssub.s32 %s17, 1
        %s157 = sand.u32 %s30, 1
        %s158 = scalar_lea.sflag [#allocation3], %s157
        %s159 = sand.u32 %s30, 1
        %s160 = smul.addr %s159, 8
        %s161 = scalar_lea.vmem [#allocation2], %s160
        // Predicated region
        $region29: #{tpu_custom_call.1} parent=27 // pred_check
          %p162 = pneg %p43
        $region30: #{tpu_custom_call.1} parent=27 // pred_check_branch
          %164 = sbr.rel (%p162) target = $region32
        $region31: #{tpu_custom_call.1} parent=27 // pred_region
          %165 = dma.done %s158, 128
        $region32: #{tpu_custom_call.1} parent=27 // pred_fallthru
          _
        %s166 = sand.u32 %s56, 1
        %s167 = scalar_lea.sflag [#allocation6], %s166
        %s168 = sand.u32 %s56, 1
        %s169 = smul.addr %s168, 8
        %s170 = scalar_lea.vmem [#allocation5], %s169
        // Predicated region
        $region33: #{tpu_custom_call.1} parent=27 // pred_check
          %p171 = pneg %p69
        $region34: #{tpu_custom_call.1} parent=27 // pred_check_branch
          %173 = sbr.rel (%p171) target = $region36
        $region35: #{tpu_custom_call.1} parent=27 // pred_region
          %174 = dma.done %s167, 128
        $region36: #{tpu_custom_call.1} parent=27 // pred_fallthru
          _
        %s175 = sand.u32 %s30, 1
        %s176 = scalar_lea.sflag [#allocation3], %s175
        %s177 = sand.u32 %s30, 1
        %s178 = smul.addr %s177, 8
        %s179 = scalar_lea.vmem [#allocation2], %s178
        %p180 = pneg %p43
        %p181 = pneg %p40
        %s182 = sand.u32 %s56, 1
        %s183 = scalar_lea.sflag [#allocation6], %s182
        %s184 = sand.u32 %s56, 1
        %s185 = smul.addr %s184, 8
        %s186 = scalar_lea.vmem [#allocation5], %s185
        %p187 = pneg %p69
        %p188 = pneg %p66
        %p189 = pneg %p95
        %p190 = pneg %p92
        %s191 = sand.u32 %s82, 1
        %s192 = scalar_lea.sflag [#allocation4], %s191
        %s193 = sand.u32 %s82, 1
        %s194 = smul.addr %s193, 8
        %s195 = scalar_lea.vmem [#allocation7], %s194
        %v196 = vld [vmem:[%s161] sm:$0xff]
        %v197 = vld [vmem:[%s170] sm:$0xff]
        %198 = vmax.xlane.f32.xlu0 %v196
        %v199 = vpop.xlane.xlu0 %198
        %v200 = vsub.f32 %v196, %v199
        %201 = vmax.xlane.f32.xlu0 %v197
        %v202 = vpop.xlane.xlu0 %201
        %v203 = vsub.f32 %v197, %v202
        %v204 = vmul.f32 %v200, 1.442695
        %v205 = vpow.pop %v204
        %206 = vadd.xlane.f32.xlu0 %v205
        %v207 = vpop.xlane.xlu0 %206
        %v208 = vmul.f32 %v203, 1.442695
        %v209 = vpow.pop %v208
        %210 = vadd.xlane.f32.xlu0 %v209
        %v211 = vpop.xlane.xlu0 %210
        %v212 = vsub.f32 %v203, %v200
        %v213 = vmul.f32 %v209, %v212
        %214 = vadd.xlane.f32.xlu0 %v213
        %v215 = vpop.xlane.xlu0 %214
        %v216 = vrcp.pop %v211
        %v217 = vmul.f32 %v215, %v216
        %v218 = vlog2.pop %v207
        %v219 = vmul.f32 %v218, 0.6931472
        %v220 = vlog2.pop %v211
        %v221 = vmul.f32 %v220, 0.6931472
        %v222 = vsub.f32 %v219, %v221
        %v223 = vadd.f32 %v217, %v222
        %v224 = vlaneseq
        %v225 = vshrl.u32 %v224, 7
        %s226 = smul.u32 %s22, 8
        %v227 = vstv %s226
        %v228 = vadd.s32 %v225, %v227
        %vm229 = vcmp.lt.s32.totalorder %v228, 20
        %v230 = vsel %vm229, %v223, 0.0
        %vm231 = vcmask 7168
        %v232 = vsel %vm231, %v230, 0.0
        %233 = vadd.xlane.f32.xlu0 %v232
        %v234 = vpop.xlane.xlu0 %233
        %v235 = vrot.slane %v234, 4
        %v236 = vadd.f32 %v234, %v235
        %v237 = vrot.slane %v236, 2
        %v238 = vadd.f32 %v236, %v237
        %v239 = vrot.slane %v238, 1
        %v240 = vadd.f32 %v238, %v239
        %s241 = vtos %v240
        %v242 = vstv %s241
        %243 = vst [vmem:[%s195] sm:$0xff] %v242
        %s244 = sand.u32 %s82, 1
        %s245 = scalar_lea.sflag [#allocation4], %s244
        %s246 = sand.u32 %s82, 1
        %s247 = smul.addr %s246, 8
        %s248 = scalar_lea.vmem [#allocation7], %s247
        // Predicated region
        $region37: #{tpu_custom_call.1} parent=27 // pred_check
          %p249 = pneg %p92
        $region38: #{tpu_custom_call.1} parent=27 // pred_check_branch
          %251 = sbr.rel (%p249) target = $region40
        $region39: #{tpu_custom_call.1} parent=27 // pred_region
          %s253 = ssub.s32 128, 128
          %254 = vsyncadd %s245, %s253
          %s255 = smul.addr %s22, 128
          %s256 = scalar_lea.hbm %s2, %s255
          %s258 = sshll.u32 %s248, 4
          %s259 = int_to_ptr.vmem [resolvable:$true] %s258
          %261 = dma.vmem_to_hbm [thread:$0]  %s259, 128, %s256, %s245
        $region40: #{tpu_custom_call.1} parent=27 // pred_fallthru
          _
      $region28: #{tpu_custom_call.1} parent=5 // pred_fallthru
        _
      %p262 = scmp.le.s32.totalorder 2, %s17
      // Predicated region
      $region41: #{tpu_custom_call.1} parent=5 // pred_check
        %p263 = pneg %p262
      $region42: #{tpu_custom_call.1} parent=5 // pred_check_branch
        %265 = sbr.rel (%p263) target = $region44
      $region43: #{tpu_custom_call.1} parent=5 // pred_region
        %s266 = ssub.s32 %s17, 2
        // Predicated region
        $region45: #{tpu_custom_call.1} parent=43 // pred_check
          %p267 = pneg %p98
        $region46: #{tpu_custom_call.1} parent=43 // pred_check_branch
          %269 = sbr.rel (%p267) target = $region48
        $region47: #{tpu_custom_call.1} parent=43 // pred_region
          %s270 = sand.u32 %s83, 1
          %s271 = scalar_lea.sflag [#allocation4], %s270
          %s272 = sand.u32 %s83, 1
          %s273 = smul.addr %s272, 8
          %s274 = scalar_lea.vmem [#allocation7], %s273
          %275 = dma.done %s271, 128
        $region48: #{tpu_custom_call.1} parent=43 // pred_fallthru
          _
      $region44: #{tpu_custom_call.1} parent=5 // pred_fallthru
        _
    $region6: #{tpu_custom_call.1} parent=1 // loop_footer
      %s21 = sadd.s32 1, %s17
    $region7: #{tpu_custom_call.1} parent=1 // loop_footer_branch
      %16 = sbr.rel target = $region3
    $region8: #{tpu_custom_call.1} parent=1 // loop_exit
      _
    %276 = vsyncpa [#allocation3], 1
    %s277 = scalar_lea.sflag [#allocation3], 1
    %278 = vsyncpa %s277, 1
    %279 = vsyncpa [#allocation6], 1
    %s280 = scalar_lea.sflag [#allocation6], 1
    %281 = vsyncpa %s280, 1
    %282 = vsyncpa [#allocation4], 1
    %s283 = scalar_lea.sflag [#allocation4], 1
    %284 = vsyncpa %s283, 1

</llo_original>
